<compile_context>
chip_gen: v7x
topology: tpu7x:2x2x1
jax: 0.10.0
libtpu: 0.0.40
codegen_flags: <defaults>
</compile_context>

<pallas_src>
import math

import jax
import jax.numpy as jnp
from jax.experimental import pallas as pl
from jax.experimental.pallas import tpu as pltpu

BN_EPS = 1e-5


def _round_up(x, m):
    return (x + m - 1) // m * m


def _fusion_kernel(x_ref, w1_ref, gb_ref, w2_ref, b2_ref, out_ref):
    k = pl.program_id(1)

    @pl.when(k == 0)
    def _init():
        out_ref[...] = jnp.zeros_like(out_ref)

    # fc1 tile: [B, tn] -- bf16 operands (pre-cast in HBM), f32 MXU accumulation.
    h = jnp.dot(x_ref[...], w1_ref[...], preferred_element_type=jnp.float32)

    # BatchNorm1d (training mode, biased batch var) folded into per-feature scale/shift.
    # Exact: the full batch is resident for every feature tile.
    mean = jnp.mean(h, axis=0, keepdims=True)
    var = jnp.maximum(jnp.mean(h * h, axis=0, keepdims=True) - mean * mean, 0.0)
    scale = gb_ref[0:1, :] * jax.lax.rsqrt(var + BN_EPS)     # gamma * rsqrt(var+eps)
    shift = gb_ref[1:2, :] - mean * scale                    # beta  - mean*scale
    h = jnp.maximum(h * scale + shift, 0.0)                  # BN + ReLU

    # fc2 partial product, accumulated directly into the resident f32 output block.
    out_ref[...] += jnp.dot(h.astype(jnp.bfloat16), w2_ref[...],
                            preferred_element_type=jnp.float32)

    @pl.when(k == pl.num_programs(1) - 1)
    def _finalize():
        out_ref[...] += b2_ref[...]


def prepare_params(params):
    """One-time parameter prep: pad feature axes to 128 multiples, pre-cast weights to bf16,
    pack gamma/beta into a single (2, i_pad) array.  Keep this OUT of the per-call hot path."""
    w1, b1, gamma, beta, w2, b2 = params
    del b1  # inert: training-mode BN mean-centering cancels a constant per-feature bias.
    inter = w1.shape[1]
    out_size = w2.shape[1]
    i_pad = _round_up(inter, 128)
    o_pad = _round_up(out_size, 128)

    w1p = jnp.pad(w1, ((0, 0), (0, i_pad - inter))).astype(jnp.bfloat16)
    gb = jnp.pad(jnp.concatenate([gamma, beta], axis=0),
                 ((0, 0), (0, i_pad - inter))).astype(jnp.float32)      # (2, i_pad)
    w2p = jnp.pad(w2, ((0, i_pad - inter), (0, o_pad - out_size))).astype(jnp.bfloat16)
    b2p = jnp.pad(b2, ((0, 0), (0, o_pad - out_size))).astype(jnp.float32)
    return (w1p, gb, w2p, b2p, out_size)


def linear_fusion_forward(lang, visn, prepared, *, tn=None, tno=None):
    """Pallas forward of LinearFusionLayer. lang: [B, L], visn: [B, V]."""
    w1p, gb, w2p, b2p, out_size = prepared
    B = lang.shape[0]
    k_in = lang.shape[1] + visn.shape[1]
    i_pad = w1p.shape[1]
    o_pad = w2p.shape[1]

    # Largest lane-dense tiles that divide the padded axes (all comfortably inside VMEM:
    # bf16 W2 tile at 512x512 is 0.5 MiB; output accumulator is (B, tno) f32).
    if tn is None:
        tn = next(t for t in (512, 256, 128) if i_pad % t == 0)
    if tno is None:
        tno = next(t for t in (512, 256, 128) if o_pad % t == 0)

    # Concat fused here (cheap at these widths); cast activation to bf16 once per call.
    x = jnp.concatenate([lang, visn], axis=-1).astype(jnp.bfloat16)

    grid = (o_pad // tno, i_pad // tn)

    out = pl.pallas_call(
        _fusion_kernel,
        out_shape=jax.ShapeDtypeStruct((B, o_pad), jnp.float32),
        grid_spec=pltpu.PrefetchScalarGridSpec(
            num_scalar_prefetch=0,
            grid=grid,
            in_specs=[
                pl.BlockSpec((B, k_in), lambda j, k: (0, 0)),    # x (resident, bf16)
                pl.BlockSpec((k_in, tn), lambda j, k: (0, k)),   # W1 column tile (bf16)
                pl.BlockSpec((2, tn), lambda j, k: (0, k)),      # packed gamma/beta tile
                pl.BlockSpec((tn, tno), lambda j, k: (k, j)),    # W2 tile (bf16)
                pl.BlockSpec((1, tno), lambda j, k: (0, j)),     # b2 tile
            ],
            out_specs=pl.BlockSpec((B, tno), lambda j, k: (0, j)),
        ),
        compiler_params=pltpu.CompilerParams(
            # output-column tiles are independent (megacore on v7x); the intermediate axis
            # is the fc2-K reduction and must stay sequential.
            dimension_semantics=("parallel", "arbitrary"),
        ),
    )(x, w1p, gb, w2p, b2p)

    return out[:, :out_size]


def init_params(key, lang_in, visn_in, intermediate, out_size):
    """Deterministic init mirroring the PyTorch module's shapes/init.

    fc weights use xavier_uniform (as in the module); biases use PyTorch's default
    Linear bias init U(-1/sqrt(fan_in), 1/sqrt(fan_in)); BatchNorm affine params use
    PyTorch defaults gamma=1, beta=0.  Weights stored as [in, out]."""
    in_size = lang_in + visn_in
    k1, k2, k3, k4 = jax.random.split(key, 4)

    def xavier(k, fan_in, fan_out):
        limit = math.sqrt(6.0 / (fan_in + fan_out))
        return jax.random.uniform(k, (fan_in, fan_out), jnp.float32, -limit, limit)

    w1 = xavier(k1, in_size, intermediate)
    b1 = jax.random.uniform(k2, (1, intermediate), jnp.float32,
                            -1.0 / math.sqrt(in_size), 1.0 / math.sqrt(in_size))
    w2 = xavier(k3, intermediate, out_size)
    b2 = jax.random.uniform(k4, (1, out_size), jnp.float32,
                            -1.0 / math.sqrt(intermediate), 1.0 / math.sqrt(intermediate))
    gamma = jnp.ones((1, intermediate), jnp.float32)
    beta = jnp.zeros((1, intermediate), jnp.float32)
    return (w1, b1, gamma, beta, w2, b2)


def reference_forward(lang, visn, params):
    """Plain-JAX reference faithful to the PyTorch forward (b1 included, centered variance),
    with matching precision choices (bf16 MXU operands, f32 accumulation / BN math)."""
    w1, b1, gamma, beta, w2, b2 = params
    x = jnp.concatenate([lang, visn], axis=-1)
    h = jnp.dot(x.astype(jnp.bfloat16), w1.astype(jnp.bfloat16),
                preferred_element_type=jnp.float32) + b1
    mean = jnp.mean(h, axis=0, keepdims=True)
    var = jnp.mean((h - mean) ** 2, axis=0, keepdims=True)
    h = (h - mean) * jax.lax.rsqrt(var + BN_EPS) * gamma + beta
    h = jnp.maximum(h, 0.0)
    return jnp.dot(h.astype(jnp.bfloat16), w2.astype(jnp.bfloat16),
                   preferred_element_type=jnp.float32) + b2


if __name__ == "__main__":
    B = 8
    LANG_IN, VISN_IN = 16, 16
    INTERMEDIATE, OUT = 64, 32

    key = jax.random.PRNGKey(0)
    k_lang, k_visn, k_params = jax.random.split(key, 3)

    lang_feats = jax.random.normal(k_lang, (B, LANG_IN), jnp.float32)
    visn_feats = jax.random.normal(k_visn, (B, VISN_IN), jnp.float32)
    params = init_params(k_params, LANG_IN, VISN_IN, INTERMEDIATE, OUT)

    prepared = prepare_params(params)   # one-time pad + bf16 cast (outside the hot path)

    out = linear_fusion_forward(lang_feats, visn_feats, prepared)
    out = jax.block_until_ready(out)

    ref = reference_forward(lang_feats, visn_feats, params)
    assert out.shape == (B, OUT)
    assert jnp.allclose(out, ref, atol=2e-3, rtol=2e-3)

    print("KERNEL_OK")
</pallas_src>

<mosaic_0001>
module attributes {stable_mosaic.version = 11 : i64} {
  func.func @_fusion_kernel(%arg0: i32, %arg1: i32, %arg2: memref<8x32xbf16, #tpu.memory_space<vmem>>, %arg3: memref<32x128xbf16, #tpu.memory_space<vmem>>, %arg4: memref<2x128xf32, #tpu.memory_space<vmem>>, %arg5: memref<128x128xbf16, #tpu.memory_space<vmem>>, %arg6: memref<1x128xf32, #tpu.memory_space<vmem>>, %arg7: memref<8x128xf32, #tpu.memory_space<vmem>>) attributes {dimension_semantics = [#tpu.dimension_semantics<parallel>, #tpu.dimension_semantics<arbitrary>], iteration_bounds = array<i64: 1, 1>, scalar_prefetch = 0 : i64, scratch_operands = 0 : i64, tpu.core_type = #tpu.core_type<tc>, window_params = [{pipeline_mode = #tpu.pipeline_mode<synchronous>, transform_indices = @transform_0, window_bounds = array<i64: 8, 32>}, {transform_indices = @transform_1, window_bounds = array<i64: 32, 128>}, {transform_indices = @transform_2, window_bounds = array<i64: 2, 128>}, {transform_indices = @transform_3, window_bounds = array<i64: 128, 128>}, {transform_indices = @transform_4, window_bounds = array<i64: 1, 128>}, {transform_indices = @transform_5, window_bounds = array<i64: 8, 128>}]} {
    %c0_i32 = arith.constant 0 : i32
    %0 = arith.cmpi eq, %arg1, %c0_i32 : i32
    %1 = arith.extui %0 : i1 to i32
    %c0_i32_0 = arith.constant 0 : i32
    %2 = arith.cmpi ne, %1, %c0_i32_0 : i32
    scf.if %2 {
      %cst_23 = arith.constant 0.000000e+00 : f32
      %42 = vector.broadcast %cst_23 : f32 to vector<8x128xf32>
      %c0_24 = arith.constant 0 : index
      %c0_25 = arith.constant 0 : index
      %43 = vector.load %arg7[%c0_24, %c0_25] : memref<8x128xf32, #tpu.memory_space<vmem>>, vector<8x128xf32>
      tpu.vector_store %arg7[%c0_24, %c0_25], %42 {strides = array<i32>} : memref<8x128xf32, #tpu.memory_space<vmem>>, vector<8x128xf32>,
    } else {
    }
    %c0 = arith.constant 0 : index
    %c0_1 = arith.constant 0 : index
    %3 = vector.load %arg2[%c0, %c0_1] : memref<8x32xbf16, #tpu.memory_space<vmem>>, vector<8x32xbf16>
    %c0_2 = arith.constant 0 : index
    %c0_3 = arith.constant 0 : index
    %4 = vector.load %arg3[%c0_2, %c0_3] : memref<32x128xbf16, #tpu.memory_space<vmem>>, vector<32x128xbf16>
    %cst = arith.constant dense<0.000000e+00> : vector<8x128xf32>
    %5 = tpu.matmul %3, %4, %cst {dimension_numbers = #tpu.dot_dimension_numbers<[1], [0], [0], [1], [0, 0, 1, 1], [], []>} : vector<8x32xbf16>, vector<32x128xbf16>, vector<8x128xf32> -> vector<8x128xf32>
    %cst_4 = arith.constant dense<0.000000e+00> : vector<128xf32>
    %6 = vector.multi_reduction <add>, %5, %cst_4 [0] : vector<8x128xf32> to vector<128xf32>
    %7 = vector.shape_cast %6 : vector<128xf32> to vector<1x128xf32>
    %cst_5 = arith.constant 8.000000e+00 : f32
    %8 = vector.broadcast %cst_5 : f32 to vector<1x128xf32>
    %9 = arith.divf %7, %8 : vector<1x128xf32>
    %10 = arith.mulf %5, %5 : vector<8x128xf32>
    %cst_6 = arith.constant dense<0.000000e+00> : vector<128xf32>
    %11 = vector.multi_reduction <add>, %10, %cst_6 [0] : vector<8x128xf32> to vector<128xf32>
    %12 = vector.shape_cast %11 : vector<128xf32> to vector<1x128xf32>
    %cst_7 = arith.constant 8.000000e+00 : f32
    %13 = vector.broadcast %cst_7 : f32 to vector<1x128xf32>
    %14 = arith.divf %12, %13 : vector<1x128xf32>
    %15 = arith.mulf %9, %9 : vector<1x128xf32>
    %16 = arith.subf %14, %15 : vector<1x128xf32>
    %cst_8 = arith.constant 0.000000e+00 : f32
    %17 = vector.broadcast %cst_8 : f32 to vector<1x128xf32>
    %18 = arith.maximumf %16, %17 : vector<1x128xf32>
    %c0_9 = arith.constant 0 : index
    %c0_10 = arith.constant 0 : index
    %19 = vector.load %arg4[%c0_9, %c0_10] : memref<2x128xf32, #tpu.memory_space<vmem>>, vector<1x128xf32>
    %cst_11 = arith.constant 9.99999974E-6 : f32
    %20 = vector.broadcast %cst_11 : f32 to vector<1x128xf32>
    %21 = arith.addf %18, %20 : vector<1x128xf32>
    %22 = math.rsqrt %21 : vector<1x128xf32>
    %23 = arith.mulf %19, %22 : vector<1x128xf32>
    %c1 = arith.constant 1 : index
    %c0_12 = arith.constant 0 : index
    %24 = vector.load %arg4[%c1, %c0_12] : memref<2x128xf32, #tpu.memory_space<vmem>>, vector<1x128xf32>
    %25 = arith.mulf %9, %23 : vector<1x128xf32>
    %26 = arith.subf %24, %25 : vector<1x128xf32>
    %27 = vector.broadcast %23 : vector<1x128xf32> to vector<8x128xf32>
    %28 = arith.mulf %5, %27 : vector<8x128xf32>
    %29 = vector.broadcast %26 : vector<1x128xf32> to vector<8x128xf32>
    %30 = arith.addf %28, %29 : vector<8x128xf32>
    %cst_13 = arith.constant 0.000000e+00 : f32
    %31 = vector.broadcast %cst_13 : f32 to vector<8x128xf32>
    %32 = arith.maximumf %30, %31 : vector<8x128xf32>
    %c0_14 = arith.constant 0 : index
    %c0_15 = arith.constant 0 : index
    %33 = vector.load %arg7[%c0_14, %c0_15] : memref<8x128xf32, #tpu.memory_space<vmem>>, vector<8x128xf32>
    %34 = arith.truncf %32 : vector<8x128xf32> to vector<8x128xbf16>
    %c0_16 = arith.constant 0 : index
    %c0_17 = arith.constant 0 : index
    %35 = vector.load %arg5[%c0_16, %c0_17] : memref<128x128xbf16, #tpu.memory_space<vmem>>, vector<128x128xbf16>
    %cst_18 = arith.constant dense<0.000000e+00> : vector<8x128xf32>
    %36 = tpu.matmul %34, %35, %cst_18 {dimension_numbers = #tpu.dot_dimension_numbers<[1], [0], [0], [1], [0, 0, 1, 1], [], []>} : vector<8x128xbf16>, vector<128x128xbf16>, vector<8x128xf32> -> vector<8x128xf32>
    %37 = arith.addf %33, %36 : vector<8x128xf32>
    %c0_19 = arith.constant 0 : index
    %c0_20 = arith.constant 0 : index
    %38 = vector.load %arg7[%c0_19, %c0_20] : memref<8x128xf32, #tpu.memory_space<vmem>>, vector<8x128xf32>
    tpu.vector_store %arg7[%c0_19, %c0_20], %37 {strides = array<i32>} : memref<8x128xf32, #tpu.memory_space<vmem>>, vector<8x128xf32>,
    %c0_i32_21 = arith.constant 0 : i32
    %39 = arith.cmpi eq, %arg1, %c0_i32_21 : i32
    %40 = arith.extui %39 : i1 to i32
    %c0_i32_22 = arith.constant 0 : i32
    %41 = arith.cmpi ne, %40, %c0_i32_22 : i32
    scf.if %41 {
      %c0_23 = arith.constant 0 : index
      %c0_24 = arith.constant 0 : index
      %42 = vector.load %arg7[%c0_23, %c0_24] : memref<8x128xf32, #tpu.memory_space<vmem>>, vector<8x128xf32>
      %c0_25 = arith.constant 0 : index
      %c0_26 = arith.constant 0 : index
      %43 = vector.load %arg6[%c0_25, %c0_26] : memref<1x128xf32, #tpu.memory_space<vmem>>, vector<1x128xf32>
      %44 = vector.broadcast %43 : vector<1x128xf32> to vector<8x128xf32>
      %45 = arith.addf %42, %44 : vector<8x128xf32>
      %c0_27 = arith.constant 0 : index
      %c0_28 = arith.constant 0 : index
      %46 = vector.load %arg7[%c0_27, %c0_28] : memref<8x128xf32, #tpu.memory_space<vmem>>, vector<8x128xf32>
      tpu.vector_store %arg7[%c0_27, %c0_28], %45 {strides = array<i32>} : memref<8x128xf32, #tpu.memory_space<vmem>>, vector<8x128xf32>,
    } else {
    }
    return
  }
  func.func @transform_0(%arg0: i32, %arg1: i32) -> (i32, i32) {
    %c0_i32 = arith.constant 0 : i32
    %c0_i32_0 = arith.constant 0 : i32
    %c0_i32_1 = arith.constant 0 : i32
    return %c0_i32, %c0_i32_0 : i32, i32
  }
  func.func @transform_1(%arg0: i32, %arg1: i32) -> (i32, i32) {
    %c0_i32 = arith.constant 0 : i32
    %c0_i32_0 = arith.constant 0 : i32
    return %c0_i32, %arg1 : i32, i32
  }
  func.func @transform_2(%arg0: i32, %arg1: i32) -> (i32, i32) {
    %c0_i32 = arith.constant 0 : i32
    %c0_i32_0 = arith.constant 0 : i32
    return %c0_i32, %arg1 : i32, i32
  }
  func.func @transform_3(%arg0: i32, %arg1: i32) -> (i32, i32) {
    %c0_i32 = arith.constant 0 : i32
    return %arg1, %arg0 : i32, i32
  }
  func.func @transform_4(%arg0: i32, %arg1: i32) -> (i32, i32) {
    %c0_i32 = arith.constant 0 : i32
    %c0_i32_0 = arith.constant 0 : i32
    return %c0_i32, %arg0 : i32, i32
  }
  func.func @transform_5(%arg0: i32, %arg1: i32) -> (i32, i32) {
    %c0_i32 = arith.constant 0 : i32
    %c0_i32_0 = arith.constant 0 : i32
    return %c0_i32, %arg0 : i32, i32
  }
}

</mosaic_0001>

<llo_original>
// kernel: tpu_custom_call.1
$region0: #{tpu_custom_call.1}
  #allocation0 [shape = 'u32[]', space=smem, size = 0x4, offset = 0x4, fixed_abs, tag = 'smem constant byte address 0x4 - core index']
  #allocation1 [shape = 'u32[144,128]{1,0:T(1,128)}', space=vmem, size = 0x12000, scoped, tag = 'internal scratch']
  %s0 = inlined_call_operand.hbm [shape: bf16[8,32], index: 0, kind: input, shape index: {}]
  %s1 = inlined_call_operand.hbm [shape: bf16[32,128], index: 1, kind: input, shape index: {}]
  %s2 = inlined_call_operand.vmem [shape: f32[2,128], index: 2, kind: input, shape index: {}]
  %s3 = inlined_call_operand.hbm [shape: bf16[128,128], index: 3, kind: input, shape index: {}]
  %s4 = inlined_call_operand.vmem [shape: f32[1,128], index: 4, kind: input, shape index: {}]
  %s5 = inlined_call_operand.hbm [shape: f32[8,128], index: 5, kind: output, shape index: {}]
  %s6 = sld [smem:[#allocation0]]
  $region50: #{tpu_custom_call.1} parent=0
    _
  %s8 = ssub.s32 1, %s6
  %s9 = scalar_select 0, %s8, %s6
  $region1: #{tpu_custom_call.1} parent=0
    #allocation2 [shape = 'u8[2048]{0}', space=vmem, size = 0x800, scoped, tag = 'input window, operand 0, single buffered']
    #allocation3 [shape = 's32[1]{0}', space=sflag, size = 0x4, scoped, tag = 'scoped memory for tpu_custom_call.1']
    #allocation4 [shape = 's32[1]{0}', space=sflag, size = 0x4, scoped, tag = 'scoped memory for tpu_custom_call.1']
    #allocation5 [shape = 'u8[8192]{0}', space=vmem, size = 0x2000, scoped, tag = 'input window, operand 1, single buffered']
    #allocation6 [shape = 's32[1]{0}', space=sflag, size = 0x4, scoped, tag = 'scoped memory for tpu_custom_call.1']
    #allocation7 [shape = 'u8[32768]{0}', space=vmem, size = 0x8000, scoped, tag = 'input window, operand 3, single buffered']
    #allocation8 [shape = 'u8[4096]{0}', space=vmem, size = 0x1000, scoped, tag = 'output window, operand 0, single buffered']
    %10 = vsyncpa [#allocation3], 0
    %11 = vsyncpa [#allocation6], 0
    %12 = vsyncpa [#allocation4], 0
    // Predicated region
    $region2: #{tpu_custom_call.1} parent=1 // pred_check
      _
    $region3: #{tpu_custom_call.1} parent=1 // pred_check_branch
      %14 = sbr.rel (0) target = $region5
    $region4: #{tpu_custom_call.1} parent=1 // pred_region
      %s16 = ssub.s32 64, 64
      %17 = vsyncadd [#allocation3], %s16
      %s19 = sshll.u32 [#allocation2], 4
      %s20 = int_to_ptr.vmem [resolvable:$true] %s19
      %22 = dma.hbm_to_vmem [thread:$0]  %s0, 64, %s20, [#allocation3]
    $region5: #{tpu_custom_call.1} parent=1 // pred_fallthru
      _
    // Predicated region
    $region6: #{tpu_custom_call.1} parent=1 // pred_check
      _
    $region7: #{tpu_custom_call.1} parent=1 // pred_check_branch
      %24 = sbr.rel (0) target = $region9
    $region8: #{tpu_custom_call.1} parent=1 // pred_region
      %s26 = ssub.s32 256, 256
      %27 = vsyncadd [#allocation6], %s26
      %s28 = sshll.u32 [#allocation5], 4
      %s29 = int_to_ptr.vmem [resolvable:$true] %s28
      %34 = dma.hbm_to_vmem [thread:$0]  %s1, 256, %s29, [#allocation6], 64, 64, 4
    $region9: #{tpu_custom_call.1} parent=1 // pred_fallthru
      _
    // Predicated region
    $region10: #{tpu_custom_call.1} parent=1 // pred_check
      _
    $region11: #{tpu_custom_call.1} parent=1 // pred_check_branch
      %36 = sbr.rel (0) target = $region13
    $region12: #{tpu_custom_call.1} parent=1 // pred_region
      _
    $region13: #{tpu_custom_call.1} parent=1 // pred_fallthru
      _
    // Predicated region
    $region14: #{tpu_custom_call.1} parent=1 // pred_check
      _
    $region15: #{tpu_custom_call.1} parent=1 // pred_check_branch
      %38 = sbr.rel (0) target = $region17
    $region16: #{tpu_custom_call.1} parent=1 // pred_region
      %s40 = ssub.s32 1024, 1024
      %41 = vsyncadd [#allocation6], %s40
      %s42 = sshll.u32 [#allocation7], 4
      %s43 = int_to_ptr.vmem [resolvable:$true] %s42
      %48 = dma.hbm_to_vmem [thread:$0]  %s3, 1024, %s43, [#allocation6], 64, 64, 4
    $region17: #{tpu_custom_call.1} parent=1 // pred_fallthru
      _
    // Predicated region
    $region18: #{tpu_custom_call.1} parent=1 // pred_check
      _
    $region19: #{tpu_custom_call.1} parent=1 // pred_check_branch
      %50 = sbr.rel (0) target = $region21
    $region20: #{tpu_custom_call.1} parent=1 // pred_region
      _
    $region21: #{tpu_custom_call.1} parent=1 // pred_fallthru
      _
    // Predicated region
    $region22: #{tpu_custom_call.1} parent=1 // pred_check
      _
    $region23: #{tpu_custom_call.1} parent=1 // pred_check_branch
      %52 = sbr.rel (0) target = $region25
    $region24: #{tpu_custom_call.1} parent=1 // pred_region
      %53 = dma.done [#allocation3], 64
    $region25: #{tpu_custom_call.1} parent=1 // pred_fallthru
      _
    // Predicated region
    $region26: #{tpu_custom_call.1} parent=1 // pred_check
      _
    $region27: #{tpu_custom_call.1} parent=1 // pred_check_branch
      %55 = sbr.rel (0) target = $region29
    $region28: #{tpu_custom_call.1} parent=1 // pred_region
      %56 = dma.done [#allocation6], 256
    $region29: #{tpu_custom_call.1} parent=1 // pred_fallthru
      _
    // Predicated region
    $region30: #{tpu_custom_call.1} parent=1 // pred_check
      _
    $region31: #{tpu_custom_call.1} parent=1 // pred_check_branch
      %58 = sbr.rel (0) target = $region33
    $region32: #{tpu_custom_call.1} parent=1 // pred_region
      %59 = dma.done [#allocation6], 1024
    $region33: #{tpu_custom_call.1} parent=1 // pred_fallthru
      _
    %p61 = scmp.eq.s32.totalorder 0, 0
    // Predicated region
    $region34: #{tpu_custom_call.1} parent=1 // pred_check
      %p62 = pneg %p61
    $region35: #{tpu_custom_call.1} parent=1 // pred_check_branch
      %64 = sbr.rel (%p62) target = $region37
    $region36: #{tpu_custom_call.1} parent=1 // pred_region
      %65 = vst [vmem:[#allocation8] sm:$0xff] 0.0
    $region37: #{tpu_custom_call.1} parent=1 // pred_fallthru
      _
    %v66 = vld [vmem:[#allocation2] sm:$0xf]
    %v67 = vld [vmem:[#allocation5] sm:$0xf]
    %v68 = vld [vmem:[#allocation5 + $0x4] sm:$0xf]
    %v69 = vld [vmem:[#allocation5 + $0x8] sm:$0xf]
    %v70 = vld [vmem:[#allocation5 + $0xc] sm:$0xf]
    %v75 = vunpack.c.l.b16 %v67
    %v76 = vunpack.c.l.b16 %v68
    %v77 = vunpack.c.l.b16 %v69
    %v78 = vunpack.c.l.b16 %v70
    %v79 = vpack.c.b16 %v76, %v75
    %v80 = vpack.c.b16 %v78, %v77
    %vm83 = vcmask 261120
    %v85 = vsel %vm83, %v66, 0
    %87 = vmatprep.subr.bf16.mxu0 0
    %88 = vmatpush1.bf16.msra.mxu0 %v79
    %89 = vmatprep.subr.bf16.mxu0 0
    %90 = vmatpush1.bf16.msra.mxu0 %v80
    %91 = vmatprep.subr.bf16.mxu0 0
    %92 = vmatpush1.bf16.msra.mxu0 0
    %93 = vmatprep.subr.bf16.mxu0 0
    %94 = vmatpush1.bf16.msra.mxu0 0
    %95 = vmatprep.subr.bf16.mxu0 0
    %96 = vmatpush1.bf16.msra.mxu0 0
    %97 = vmatprep.subr.bf16.mxu0 0
    %98 = vmatpush1.bf16.msra.mxu0 0
    %99 = vmatprep.subr.bf16.mxu0 0
    %100 = vmatpush1.bf16.msra.mxu0 0
    %101 = vmatprep.subr.bf16.mxu0 0
    %102 = vmatpush1.bf16.msra.mxu0 0
    %103 = vmatprep.subr.bf16.mxu0 0
    %104 = vmatpush1.bf16.msra.mxu0 0
    %105 = vmatprep.subr.bf16.mxu0 0
    %106 = vmatpush1.bf16.msra.mxu0 0
    %107 = vmatprep.subr.bf16.mxu0 0
    %108 = vmatpush1.bf16.msra.mxu0 0
    %109 = vmatprep.subr.bf16.mxu0 0
    %110 = vmatpush1.bf16.msra.mxu0 0
    %111 = vmatprep.subr.bf16.mxu0 0
    %112 = vmatpush1.bf16.msra.mxu0 0
    %113 = vmatprep.subr.bf16.mxu0 0
    %114 = vmatpush1.bf16.msra.mxu0 0
    %115 = vmatprep.subr.bf16.mxu0 0
    %116 = vmatpush1.bf16.msra.mxu0 0
    %117 = vmatprep.subr.bf16.mxu0 0
    %118 = vmatpush1.bf16.msra.mxu0 0
    %119 = vmatprep.mubr.bf16.mxu0 0
    %120 = vmatmul.mubr.bf16.gmra.mrb[0].mxu0 %v85
    %v121 = vpop.f32.mrb[0].mxu0
    %v122 = vadd.f32 0.0, %v121
    %v123 = vpop.f32.mrb[0].mxu0
    %v124 = vpop.f32.mrb[0].mxu0
    %v125 = vpop.f32.mrb[0].mxu0
    %126 = vdwg.mxu0
    %v127 = vrot.slane %v122, 4
    %v128 = vadd.f32 %v122, %v127
    %v129 = vrot.slane %v128, 2
    %v130 = vadd.f32 %v128, %v129
    %v131 = vrot.slane %v130, 1
    %v132 = vadd.f32 %v130, %v131
    %v133 = vrcp.pop 8.0
    %v134 = vmul.f32 %v132, %v133
    %v135 = vmul.f32 %v122, %v122
    %v136 = vrot.slane %v135, 4
    %v137 = vadd.f32 %v135, %v136
    %v138 = vrot.slane %v137, 2
    %v139 = vadd.f32 %v137, %v138
    %v140 = vrot.slane %v139, 1
    %v141 = vadd.f32 %v139, %v140
    %v142 = vmul.f32 %v141, %v133
    %v143 = vmul.f32 %v134, %v134
    %v144 = vsub.f32 %v142, %v143
    %v145 = vmax.f32 %v144, 0.0
    %v146 = vld [vmem:[%s2] sm:$0x1]
    %v147 = vadd.f32 %v145, 1e-05
    %v148 = vrsqrt.pop %v147
    %v149 = vmul.f32 %v146, %v148
    %v150 = vld [vmem:[%s2 + $0x1] sm:$0x1]
    %v151 = vmul.f32 %v134, %v149
    %v152 = vsub.f32 %v150, %v151
    %v153 = vlaneseq
    %v154 = vshrl.u32 %v153, 7
    %v155 = vsub.s32 0, %v154
    %v156 = vrot.slane %v149, %v155
    %v157 = vmul.f32 %v122, %v156
    %v158 = vlaneseq
    %v159 = vshrl.u32 %v158, 7
    %v160 = vsub.s32 0, %v159
    %v161 = vrot.slane %v152, %v160
    %v162 = vadd.f32 %v157, %v161
    %v163 = vmax.f32 %v162, 0.0
    %v164 = vld [vmem:[#allocation8] sm:$0xff]
    %v165 = vpack.c.bf16 %v163, %v163
    %v166 = vld [vmem:[#allocation7] sm:$0xf]
    %v167 = vld [vmem:[#allocation7 + $0x4] sm:$0xf]
    %v168 = vld [vmem:[#allocation7 + $0x8] sm:$0xf]
    %v169 = vld [vmem:[#allocation7 + $0xc] sm:$0xf]
    %v170 = vld [vmem:[#allocation7 + $0x10] sm:$0xf]
    %v171 = vld [vmem:[#allocation7 + $0x14] sm:$0xf]
    %v172 = vld [vmem:[#allocation7 + $0x18] sm:$0xf]
    %v173 = vld [vmem:[#allocation7 + $0x1c] sm:$0xf]
    %v174 = vld [vmem:[#allocation7 + $0x20] sm:$0xf]
    %v175 = vld [vmem:[#allocation7 + $0x24] sm:$0xf]
    %v176 = vld [vmem:[#allocation7 + $0x28] sm:$0xf]
    %v177 = vld [vmem:[#allocation7 + $0x2c] sm:$0xf]
    %v178 = vld [vmem:[#allocation7 + $0x30] sm:$0xf]
    %v179 = vld [vmem:[#allocation7 + $0x34] sm:$0xf]
    %v180 = vld [vmem:[#allocation7 + $0x38] sm:$0xf]
    %v181 = vld [vmem:[#allocation7 + $0x3c] sm:$0xf]
    %v198 = vunpack.c.l.b16 %v166
    %v199 = vunpack.c.l.b16 %v167
    %v200 = vunpack.c.l.b16 %v168
    %v201 = vunpack.c.l.b16 %v169
    %v202 = vunpack.c.l.b16 %v170
    %v203 = vunpack.c.l.b16 %v171
    %v204 = vunpack.c.l.b16 %v172
    %v205 = vunpack.c.l.b16 %v173
    %v206 = vunpack.c.l.b16 %v174
    %v207 = vunpack.c.l.b16 %v175
    %v208 = vunpack.c.l.b16 %v176
    %v209 = vunpack.c.l.b16 %v177
    %v210 = vunpack.c.l.b16 %v178
    %v211 = vunpack.c.l.b16 %v179
    %v212 = vunpack.c.l.b16 %v180
    %v213 = vunpack.c.l.b16 %v181
    %v214 = vpack.c.b16 %v199, %v198
    %v215 = vpack.c.b16 %v201, %v200
    %v216 = vpack.c.b16 %v203, %v202
    %v217 = vpack.c.b16 %v205, %v204
    %v218 = vpack.c.b16 %v207, %v206
    %v219 = vpack.c.b16 %v209, %v208
    %v220 = vpack.c.b16 %v211, %v210
    %v221 = vpack.c.b16 %v213, %v212
    %230 = vmatprep.subr.bf16.mxu0 0
    %231 = vmatpush1.bf16.msra.mxu0 %v214
    %232 = vmatprep.subr.bf16.mxu0 0
    %233 = vmatpush1.bf16.msra.mxu0 %v215
    %234 = vmatprep.subr.bf16.mxu0 0
    %235 = vmatpush1.bf16.msra.mxu0 %v216
    %236 = vmatprep.subr.bf16.mxu0 0
    %237 = vmatpush1.bf16.msra.mxu0 %v217
    %238 = vmatprep.subr.bf16.mxu0 0
    %239 = vmatpush1.bf16.msra.mxu0 %v218
    %240 = vmatprep.subr.bf16.mxu0 0
    %241 = vmatpush1.bf16.msra.mxu0 %v219
    %242 = vmatprep.subr.bf16.mxu0 0
    %243 = vmatpush1.bf16.msra.mxu0 %v220
    %244 = vmatprep.subr.bf16.mxu0 0
    %245 = vmatpush1.bf16.msra.mxu0 %v221
    %246 = vmatprep.subr.bf16.mxu0 0
    %247 = vmatpush1.bf16.msra.mxu0 0
    %248 = vmatprep.subr.bf16.mxu0 0
    %249 = vmatpush1.bf16.msra.mxu0 0
    %250 = vmatprep.subr.bf16.mxu0 0
    %251 = vmatpush1.bf16.msra.mxu0 0
    %252 = vmatprep.subr.bf16.mxu0 0
    %253 = vmatpush1.bf16.msra.mxu0 0
    %254 = vmatprep.subr.bf16.mxu0 0
    %255 = vmatpush1.bf16.msra.mxu0 0
    %256 = vmatprep.subr.bf16.mxu0 0
    %257 = vmatpush1.bf16.msra.mxu0 0
    %258 = vmatprep.subr.bf16.mxu0 0
    %259 = vmatpush1.bf16.msra.mxu0 0
    %260 = vmatprep.subr.bf16.mxu0 0
    %261 = vmatpush1.bf16.msra.mxu0 0
    %262 = vmatprep.mubr.bf16.mxu0 0
    %263 = vmatmul.mubr.bf16.gmra.mrb[0].mxu0 %v165
    %v264 = vpop.f32.mrb[0].mxu0
    %v265 = vadd.f32 0.0, %v264
    %v266 = vpop.f32.mrb[0].mxu0
    %v267 = vpop.f32.mrb[0].mxu0
    %v268 = vpop.f32.mrb[0].mxu0
    %269 = vdwg.mxu0
    %v270 = vadd.f32 %v164, %v265
    %271 = vst [vmem:[#allocation8] sm:$0xff] %v270
    // Predicated region
    $region38: #{tpu_custom_call.1} parent=1 // pred_check
      %p272 = pneg %p61
    $region39: #{tpu_custom_call.1} parent=1 // pred_check_branch
      %274 = sbr.rel (%p272) target = $region41
    $region40: #{tpu_custom_call.1} parent=1 // pred_region
      %v275 = vld [vmem:[#allocation8] sm:$0xff]
      %v276 = vld [vmem:[%s4] sm:$0x1]
      %v278 = vlaneseq
      %v279 = vshrl.u32 %v278, 7
      %v280 = vsub.s32 0, %v279
      %v281 = vrot.slane %v276, %v280
      %v283 = vadd.f32 %v275, %v281
      %284 = vst [vmem:[#allocation8] sm:$0xff] %v283
    $region41: #{tpu_custom_call.1} parent=1 // pred_fallthru
      _
    // Predicated region
    $region42: #{tpu_custom_call.1} parent=1 // pred_check
      _
    $region43: #{tpu_custom_call.1} parent=1 // pred_check_branch
      %286 = sbr.rel (0) target = $region45
    $region44: #{tpu_custom_call.1} parent=1 // pred_region
      %s288 = ssub.s32 128, 128
      %289 = vsyncadd [#allocation4], %s288
      %s291 = sshll.u32 [#allocation8], 4
      %s292 = int_to_ptr.vmem [resolvable:$true] %s291
      %294 = dma.vmem_to_hbm [thread:$0]  %s292, 128, %s5, [#allocation4]
    $region45: #{tpu_custom_call.1} parent=1 // pred_fallthru
      _
    // Predicated region
    $region46: #{tpu_custom_call.1} parent=1 // pred_check
      _
    $region47: #{tpu_custom_call.1} parent=1 // pred_check_branch
      %296 = sbr.rel (0) target = $region49
    $region48: #{tpu_custom_call.1} parent=1 // pred_region
      %297 = dma.done [#allocation4], 128
    $region49: #{tpu_custom_call.1} parent=1 // pred_fallthru
      _
    %298 = vsyncpa [#allocation3], 1
    %299 = vsyncpa [#allocation6], 1
    %300 = vsyncpa [#allocation4], 1

</llo_original>
